<compile_context>
chip_gen: v7x
topology: tpu7x:2x2x1
jax: 0.10.0
libtpu: 0.0.40
codegen_flags: <defaults>
</compile_context>

<pallas_src>
import jax
import jax.numpy as jnp
from jax.experimental import pallas as pl
from jax.experimental.pallas import tpu as pltpu


def _cdiv(a, b):
    return -(-a // b)


def _round_up(x, m):
    return _cdiv(x, m) * m


def _pick_tile(dim, tmax, align):
    """Tile size (multiple of `align`, <= tmax) that minimizes pad waste for `dim`."""
    tmax = max(align, (tmax // align) * align)
    dim_a = _round_up(dim, align)
    if dim_a <= tmax:
        return dim_a
    best_t = tmax
    best_w = _round_up(dim, tmax) - dim
    n0 = _cdiv(dim, tmax)
    for n in range(n0, n0 + 8):
        t = min(tmax, _round_up(_cdiv(dim, n), align))
        w = _round_up(dim, t) - dim
        if w < best_w or (w == best_w and t > best_t):
            best_t, best_w = t, w
    return best_t


def _buf_bytes(shape, esize):
    """Approx VMEM footprint of one buffer including (sublane, lane) padding."""
    *lead, s, l = shape
    n = 1
    for x in lead:
        n *= x
    return n * _round_up(max(s, 1), 8) * _round_up(max(l, 1), 128) * esize


def _vmem_budget():
    """(per-step VMEM budget, vmem_limit_bytes) — generation aware."""
    cap = 64 * 1024 * 1024            # conservative default (v7x per-TensorCore VMEM)
    try:
        cap = int(getattr(pltpu.get_tpu_info(), "vmem_capacity_bytes", cap))
    except Exception:
        pass
    limit = min(100 * 1024 * 1024, (cap * 3) // 4)   # scoped-VMEM limit we request
    budget = limit - 8 * 1024 * 1024                  # headroom for compiler scratch
    return budget, limit


def _epilogue(dot_f32, asq, bsq, c, o_ref, approx):
    # ||a_i - b_j||^2 = ||a_i||^2 + ||b_j||^2 - 2 a_i.b_j  (clamped for cancellation)
    d2 = jnp.maximum(asq + bsq - 2.0 * dot_f32, 0.0)
    dist = jnp.sqrt(d2)
    if approx:
        out = c * pl.reciprocal(dist + c, approx=True)   # divide on the EUP slot
    else:
        out = c / (dist + c)
    o_ref[...] = out.astype(o_ref.dtype)


def _make_direct_kernel(approx):
    """Single D-block path: no accumulator scratch, no init/finalize branches."""
    def kernel(bias_ref, a_ref, bT_ref, asq_ref, bsq_ref, o_ref):
        dot = jnp.einsum("bmd,bdn->bmn", a_ref[...], bT_ref[...],
                         preferred_element_type=jnp.float32)
        _epilogue(dot, asq_ref[...], bsq_ref[...], bias_ref[0], o_ref, approx)
    return kernel


def _make_acc_kernel(td, a_resident, approx):
    """D tiled over an 'arbitrary' grid axis with an f32 VMEM accumulator."""
    def kernel(bias_ref, a_ref, bT_ref, asq_ref, bsq_ref, o_ref, acc_ref):
        k = pl.program_id(3)

        @pl.when(k == 0)
        def _():
            acc_ref[...] = jnp.zeros_like(acc_ref)

        if a_resident:
            # Full-D A block is j/k-invariant (stays resident in VMEM); slice the
            # current 128-aligned contraction chunk in-kernel.
            a_chunk = a_ref[:, :, pl.ds(pl.multiple_of(k * td, td), td)]
        else:
            a_chunk = a_ref[...]
        acc_ref[...] += jnp.einsum("bmd,bdn->bmn", a_chunk, bT_ref[...],
                                   preferred_element_type=jnp.float32)

        @pl.when(k == pl.num_programs(3) - 1)
        def _():
            _epilogue(acc_ref[...], asq_ref[...], bsq_ref[...], bias_ref[0],
                      o_ref, approx)
    return kernel


def dist_matrix(a, b, bias, *, eps=1e-8, tm_max=512, tn_max=None, td_max=2048,
                use_bf16_matmul=False, out_dtype=jnp.float32,
                approx_reciprocal=True):
    """(bias + eps) / (cdist(a, b) + bias + eps).  a: (B,M,D), b: (B,N,D) -> (B,M,N)."""
    a = jnp.asarray(a, jnp.float32)
    b = jnp.asarray(b, jnp.float32)
    bias_c = jnp.asarray(bias, jnp.float32).reshape((1,)) + jnp.float32(eps)

    B, M, D = a.shape
    Bb, N, Db = b.shape
    assert B == Bb and D == Db, "a (B,M,D) and b (B,N,D) must share batch/feature dims"

    budget, vmem_limit = _vmem_budget()
    if tn_max is None:
        tn_max = 1024 if budget >= 64 * 1024 * 1024 else 512

    in_esize = 2 if use_bf16_matmul else 4
    out_esize = jnp.dtype(out_dtype).itemsize
    m_align = 16 if (use_bf16_matmul or out_esize < 4) else 8

    # ---- divisor-aware tiles (tn lane-dense: multiple of 128) --------------------
    tm = _pick_tile(M, tm_max, m_align)
    tn = _pick_tile(N, tn_max, 128)
    m_pad, n_pad = _round_up(M, tm), _round_up(N, tn)
    gm, gn = m_pad // tm, n_pad // tn

    def _step_single(bt_):
        return 2 * (_buf_bytes((bt_, tm, D), in_esize)
                    + _buf_bytes((bt_, D, tn), in_esize)
                    + _buf_bytes((bt_, tm, 1), 4)
                    + _buf_bytes((bt_, 1, tn), 4)
                    + _buf_bytes((bt_, tm, tn), out_esize))

    single_k = (D <= td_max) and (_step_single(1) <= budget)

    if single_k:
        td, d_pad, a_resident = D, D, False
        step_fn = _step_single
    else:
        td = min(_round_up(td_max, 128), _round_up(D, 128))
        d_pad = _round_up(D, td)

        def _step_multi(bt_, resident):
            a_d = d_pad if resident else td
            return (2 * (_buf_bytes((bt_, tm, a_d), in_esize)
                         + _buf_bytes((bt_, td, tn), in_esize)
                         + _buf_bytes((bt_, tm, 1), 4)
                         + _buf_bytes((bt_, 1, tn), 4)
                         + _buf_bytes((bt_, tm, tn), out_esize))
                    + _buf_bytes((bt_, tm, tn), 4))            # acc scratch

        while _step_multi(1, False) > budget:
            if td > 128:
                td = max(128, _round_up(td // 2, 128))
            elif tn > 128:
                tn = max(128, _round_up(tn // 2, 128))
            elif tm > m_align:
                tm = max(m_align, _round_up(tm // 2, m_align))
            else:
                break
            m_pad, n_pad = _round_up(M, tm), _round_up(N, tn)
            gm, gn = m_pad // tm, n_pad // tn
            d_pad = _round_up(D, td)

        # Full-D resident A only pays when A is reused across >=2 column tiles.
        a_resident = (gn >= 2) and (_step_multi(1, True) <= budget)
        step_fn = lambda bt_: _step_multi(bt_, a_resident)

    # ---- batch folding (amortize ~0.35us/step overhead on tiny tiles) while keeping
    # ---- >=2-way extent on a parallel axis so both v7x TensorCores stay busy -------
    bt = 1
    cap = max(1, (256 * 256) // (tm * tn))
    full_par = B * gm * gn
    for cand in range(1, B + 1):
        if B % cand or cand > cap or step_fn(cand) > budget:
            continue
        if (B // cand) * gm * gn < 2 and full_par >= 2:
            continue
        bt = cand

    # ---- pad only when needed (zero pads leave norms and dot products intact) ------
    a_p = a
    if m_pad != M or d_pad != D:
        a_p = jnp.pad(a, ((0, 0), (0, m_pad - M), (0, d_pad - D)))
    bT_p = jnp.swapaxes(b, 1, 2)                         # (B, D, N): lane-dense in N
    if n_pad != N or d_pad != D:
        bT_p = jnp.pad(bT_p, ((0, 0), (0, d_pad - D), (0, n_pad - N)))

    a_sq = jnp.sum(a_p * a_p, axis=-1, keepdims=True)    # (B, m_pad, 1)  f32
    b_sq = jnp.sum(bT_p * bT_p, axis=1, keepdims=True)   # (B, 1, n_pad)  f32

    a_in = a_p.astype(jnp.bfloat16) if use_bf16_matmul else a_p
    bT_in = bT_p.astype(jnp.bfloat16) if use_bf16_matmul else bT_p

    cost = pl.CostEstimate(
        flops=2 * B * m_pad * n_pad * d_pad,
        transcendentals=2 * B * m_pad * n_pad,           # sqrt + reciprocal
        bytes_accessed=(in_esize * B * d_pad * (m_pad + n_pad)
                        + out_esize * B * m_pad * n_pad
                        + 4 * B * (m_pad + n_pad)),
    )

    if single_k:
        b_spec = pl.BlockSpec((bt, D, tn), lambda bb, i, j: (bb, 0, j))
        if D <= 256 and (B // bt) * gm * gn > 2:
            # Small contraction => short per-step MXU time; a 3rd buffer hides the
            # streaming b-tile DMA latency.
            b_spec = pl.BlockSpec((bt, D, tn), lambda bb, i, j: (bb, 0, j),
                                  pipeline_mode=pl.Buffered(3))
        out = pl.pallas_call(
            _make_direct_kernel(approx_reciprocal),
            out_shape=jax.ShapeDtypeStruct((B, m_pad, n_pad), out_dtype),
            grid=(B // bt, gm, gn),
            in_specs=[
                pl.BlockSpec(memory_space=pltpu.SMEM),                     # bias + eps
                pl.BlockSpec((bt, tm, D), lambda bb, i, j: (bb, i, 0)),    # a
                b_spec,                                                    # b^T
                pl.BlockSpec((bt, tm, 1), lambda bb, i, j: (bb, i, 0)),    # ||a||^2
                pl.BlockSpec((bt, 1, tn), lambda bb, i, j: (bb, 0, j)),    # ||b||^2
            ],
            out_specs=pl.BlockSpec((bt, tm, tn), lambda bb, i, j: (bb, i, j)),
            compiler_params=pltpu.CompilerParams(
                dimension_semantics=("parallel", "parallel", "parallel"),
                vmem_limit_bytes=vmem_limit),
            cost_estimate=cost,
        )(bias_c, a_in, bT_in, a_sq, b_sq)
    else:
        if a_resident:
            a_spec = pl.BlockSpec((bt, tm, d_pad), lambda bb, i, j, k: (bb, i, 0))
        else:
            a_spec = pl.BlockSpec((bt, tm, td), lambda bb, i, j, k: (bb, i, k))
        out = pl.pallas_call(
            _make_acc_kernel(td, a_resident, approx_reciprocal),
            out_shape=jax.ShapeDtypeStruct((B, m_pad, n_pad), out_dtype),
            grid=(B // bt, gm, gn, d_pad // td),
            in_specs=[
                pl.BlockSpec(memory_space=pltpu.SMEM),                           # bias + eps
                a_spec,                                                          # a
                pl.BlockSpec((bt, td, tn), lambda bb, i, j, k: (bb, k, j)),      # b^T
                pl.BlockSpec((bt, tm, 1), lambda bb, i, j, k: (bb, i, 0)),       # ||a||^2
                pl.BlockSpec((bt, 1, tn), lambda bb, i, j, k: (bb, 0, j)),       # ||b||^2
            ],
            out_specs=pl.BlockSpec((bt, tm, tn), lambda bb, i, j, k: (bb, i, j)),
            scratch_shapes=[pltpu.VMEM((bt, tm, tn), jnp.float32)],
            compiler_params=pltpu.CompilerParams(
                dimension_semantics=("parallel", "parallel", "parallel", "arbitrary"),
                vmem_limit_bytes=vmem_limit),
            cost_estimate=cost,
        )(bias_c, a_in, bT_in, a_sq, b_sq)

    if m_pad != M or n_pad != N:
        out = out[:, :M, :N]
    return out


def dist_matrix_ref(a, b, bias, eps=1e-8):
    """Pure-JAX reference: exact pairwise Euclidean distance (torch.cdist p=2)."""
    diff = a[:, :, None, :] - b[:, None, :, :]
    dist = jnp.sqrt(jnp.sum(diff * diff, axis=-1))
    c = bias[0] + eps
    return c / (dist + c)


if __name__ == "__main__":
    key = jax.random.PRNGKey(0)
    k1, k2, k3, k4 = jax.random.split(key, 4)

    # Parameter init matches nn.Parameter(torch.Tensor([1.0]))
    bias = jnp.array([1.0], dtype=jnp.float32)

    # 1) Small shapes -> single-k fast path (no accumulator scratch / init branches).
    B, M, N, D = 2, 16, 16, 32
    a = jax.random.normal(k1, (B, M, D), dtype=jnp.float32)
    b = jax.random.normal(k2, (B, N, D), dtype=jnp.float32)
    out = dist_matrix(a, b, bias)
    jax.block_until_ready(out)
    ref = dist_matrix_ref(a, b, bias)
    assert out.shape == (B, M, N)
    err = float(jnp.max(jnp.abs(out - ref)))
    assert jnp.allclose(out, ref, atol=2e-3, rtol=2e-3), f"single-k max abs err = {err:e}"

    # 2) Ragged shapes + forced D tiling -> multi-k accumulator path (pad + slice).
    B2, M2, N2, D2 = 2, 24, 40, 256
    a2 = jax.random.normal(k3, (B2, M2, D2), dtype=jnp.float32)
    b2 = jax.random.normal(k4, (B2, N2, D2), dtype=jnp.float32)
    out2 = dist_matrix(a2, b2, bias, td_max=128)
    jax.block_until_ready(out2)
    ref2 = dist_matrix_ref(a2, b2, bias)
    assert out2.shape == (B2, M2, N2)
    err2 = float(jnp.max(jnp.abs(out2 - ref2)))
    assert jnp.allclose(out2, ref2, atol=2e-3, rtol=2e-3), f"multi-k max abs err = {err2:e}"

    # 3) bf16 MXU fast path + bf16 output knob (looser tolerance, opt-in only).
    out3 = dist_matrix(a, b, bias, use_bf16_matmul=True, out_dtype=jnp.bfloat16)
    jax.block_until_ready(out3)
    err3 = float(jnp.max(jnp.abs(out3.astype(jnp.float32) - ref)))
    assert jnp.allclose(out3.astype(jnp.float32), ref, atol=2e-2, rtol=2e-2), \
        f"bf16 path max abs err = {err3:e}"

    print("KERNEL_OK")
</pallas_src>

<mosaic_0001>
module attributes {stable_mosaic.version = 11 : i64} {
  func.func @kernel(%arg0: i32, %arg1: i32, %arg2: i32, %arg3: memref<1xf32, #tpu.memory_space<smem>>, %arg4: memref<1x16x32xf32, #tpu.memory_space<vmem>>, %arg5: memref<1x32x128xf32, #tpu.memory_space<vmem>>, %arg6: memref<1x16x1xf32, #tpu.memory_space<vmem>>, %arg7: memref<1x1x128xf32, #tpu.memory_space<vmem>>, %arg8: memref<1x16x128xf32, #tpu.memory_space<vmem>>) attributes {dimension_semantics = [#tpu.dimension_semantics<parallel>, #tpu.dimension_semantics<parallel>, #tpu.dimension_semantics<parallel>], iteration_bounds = array<i64: 2, 1, 1>, scalar_prefetch = 0 : i64, scratch_operands = 0 : i64, tpu.core_type = #tpu.core_type<tc>, window_params = [{transform_indices = @transform_0, window_bounds = array<i64: 1>}, {transform_indices = @transform_1, window_bounds = array<i64: 1, 16, 32>}, {transform_indices = @transform_2, window_bounds = array<i64: 1, 32, 128>}, {transform_indices = @transform_3, window_bounds = array<i64: 1, 16, 1>}, {transform_indices = @transform_4, window_bounds = array<i64: 1, 1, 128>}, {transform_indices = @transform_5, window_bounds = array<i64: 1, 16, 128>}]} {
    %c0 = arith.constant 0 : index
    %c0_0 = arith.constant 0 : index
    %c0_1 = arith.constant 0 : index
    %0 = vector.load %arg4[%c0, %c0_0, %c0_1] : memref<1x16x32xf32, #tpu.memory_space<vmem>>, vector<1x16x32xf32>
    %c0_2 = arith.constant 0 : index
    %c0_3 = arith.constant 0 : index
    %c0_4 = arith.constant 0 : index
    %1 = vector.load %arg5[%c0_2, %c0_3, %c0_4] : memref<1x32x128xf32, #tpu.memory_space<vmem>>, vector<1x32x128xf32>
    "tpu.trace_start"() <{level = 10 : i32, message = "bmd,bdn->bmn"}> : () -> ()
    %cst = arith.constant dense<0.000000e+00> : vector<1x16x128xf32>
    %2 = tpu.matmul %0, %1, %cst {dimension_numbers = #tpu.dot_dimension_numbers<[2], [1], [1], [2], [0, 0, 0, 1, 1, 2], [0], [0]>} : vector<1x16x32xf32>, vector<1x32x128xf32>, vector<1x16x128xf32> -> vector<1x16x128xf32>
    "tpu.trace_stop"() : () -> ()
    %c0_5 = arith.constant 0 : index
    %c0_6 = arith.constant 0 : index
    %c0_7 = arith.constant 0 : index
    %3 = vector.load %arg6[%c0_5, %c0_6, %c0_7] : memref<1x16x1xf32, #tpu.memory_space<vmem>>, vector<1x16x1xf32>
    %c0_8 = arith.constant 0 : index
    %c0_9 = arith.constant 0 : index
    %c0_10 = arith.constant 0 : index
    %4 = vector.load %arg7[%c0_8, %c0_9, %c0_10] : memref<1x1x128xf32, #tpu.memory_space<vmem>>, vector<1x1x128xf32>
    %c0_11 = arith.constant 0 : index
    %5 = memref.load %arg3[%c0_11] : memref<1xf32, #tpu.memory_space<smem>>
    %6 = vector.broadcast %3 : vector<1x16x1xf32> to vector<1x16x128xf32>
    %7 = vector.broadcast %4 : vector<1x1x128xf32> to vector<1x16x128xf32>
    %8 = arith.addf %6, %7 : vector<1x16x128xf32>
    %cst_12 = arith.constant 2.000000e+00 : f32
    %9 = vector.broadcast %cst_12 : f32 to vector<1x16x128xf32>
    %10 = arith.mulf %9, %2 : vector<1x16x128xf32>
    %11 = arith.subf %8, %10 : vector<1x16x128xf32>
    %cst_13 = arith.constant 0.000000e+00 : f32
    %12 = vector.broadcast %cst_13 : f32 to vector<1x16x128xf32>
    %13 = arith.maximumf %11, %12 : vector<1x16x128xf32>
    %14 = math.sqrt %13 : vector<1x16x128xf32>
    %15 = vector.broadcast %5 : f32 to vector<1x16x128xf32>
    %16 = arith.addf %14, %15 : vector<1x16x128xf32>
    %17 = tpu.reciprocal %16 {approx = true} : vector<1x16x128xf32> -> vector<1x16x128xf32>
    %18 = vector.broadcast %5 : f32 to vector<1x16x128xf32>
    %19 = arith.mulf %18, %17 : vector<1x16x128xf32>
    %c0_14 = arith.constant 0 : index
    %c0_15 = arith.constant 0 : index
    %c0_16 = arith.constant 0 : index
    %20 = vector.load %arg8[%c0_14, %c0_15, %c0_16] : memref<1x16x128xf32, #tpu.memory_space<vmem>>, vector<1x16x128xf32>
    tpu.vector_store %arg8[%c0_14, %c0_15, %c0_16], %19 {strides = array<i32>} : memref<1x16x128xf32, #tpu.memory_space<vmem>>, vector<1x16x128xf32>,
    return
  }
  func.func @transform_0(%arg0: i32, %arg1: i32, %arg2: i32) -> i32 {
    %c0_i32 = arith.constant 0 : i32
    %c0_i32_0 = arith.constant 0 : i32
    return %c0_i32 : i32
  }
  func.func @transform_1(%arg0: i32, %arg1: i32, %arg2: i32) -> (i32, i32, i32) {
    %c0_i32 = arith.constant 0 : i32
    %c0_i32_0 = arith.constant 0 : i32
    return %arg0, %arg1, %c0_i32 : i32, i32, i32
  }
  func.func @transform_2(%arg0: i32, %arg1: i32, %arg2: i32) -> (i32, i32, i32) {
    %c0_i32 = arith.constant 0 : i32
    %c0_i32_0 = arith.constant 0 : i32
    return %arg0, %c0_i32, %arg2 : i32, i32, i32
  }
  func.func @transform_3(%arg0: i32, %arg1: i32, %arg2: i32) -> (i32, i32, i32) {
    %c0_i32 = arith.constant 0 : i32
    %c0_i32_0 = arith.constant 0 : i32
    return %arg0, %arg1, %c0_i32 : i32, i32, i32
  }
  func.func @transform_4(%arg0: i32, %arg1: i32, %arg2: i32) -> (i32, i32, i32) {
    %c0_i32 = arith.constant 0 : i32
    %c0_i32_0 = arith.constant 0 : i32
    return %arg0, %c0_i32, %arg2 : i32, i32, i32
  }
  func.func @transform_5(%arg0: i32, %arg1: i32, %arg2: i32) -> (i32, i32, i32) {
    %c0_i32 = arith.constant 0 : i32
    return %arg0, %arg1, %arg2 : i32, i32, i32
  }
}

</mosaic_0001>

<llo_original>
// kernel: tpu_custom_call.1
$region0: #{tpu_custom_call.1}
  #allocation0 [shape = 'u32[]', space=smem, size = 0x4, offset = 0x4, fixed_abs, tag = 'smem constant byte address 0x4 - core index']
  #allocation1 [shape = 'u32[144,128]{1,0:T(1,128)}', space=vmem, size = 0x12000, scoped, tag = 'internal scratch']
  #allocation2 [shape = 'f32[1]{0:T(128)S(6)}', space=smem, size = 0x200, scoped, tag = 'scoped memory for tpu_custom_call.1']
  %s0 = inlined_call_operand.<no memory space> [shape: f32[1], index: 0, kind: input, shape index: {}]
  %s1 = inlined_call_operand.vmem [shape: f32[2,16,32], index: 1, kind: input, shape index: {}]
  %s2 = inlined_call_operand.hbm [shape: f32[2,32,128], index: 2, kind: input, shape index: {}]
  %s3 = inlined_call_operand.vmem [shape: f32[2,16,1], index: 3, kind: input, shape index: {}]
  %s4 = inlined_call_operand.vmem [shape: f32[2,1,128], index: 4, kind: input, shape index: {}]
  %s5 = inlined_call_operand.hbm [shape: f32[2,16,128], index: 5, kind: output, shape index: {}]
  %s6 = sld [smem:[#allocation0]]
  $region57: #{tpu_custom_call.1} parent=0
    _
  %s8 = ssub.s32 1, %s6
  %s9 = scalar_select 0, %s8, %s6
  %10 = sst [smem:[#allocation2]] %s0
  $region1: #{tpu_custom_call.1} parent=0
    #allocation3 [shape = 'u8[32768]{0}', space=vmem, size = 0x8000, scoped, tag = 'input window, operand 2']
    #allocation4 [shape = 's32[2]{0}', space=sflag, size = 0x8, scoped, tag = 'scoped memory for tpu_custom_call.1']
    #allocation5 [shape = 's32[2]{0}', space=sflag, size = 0x8, scoped, tag = 'scoped memory for tpu_custom_call.1']
    #allocation6 [shape = 'u8[16384]{0}', space=vmem, size = 0x4000, scoped, tag = 'output window, operand 0']
    %11 = vsyncpa [#allocation4], 0
    %s12 = scalar_lea.sflag [#allocation4], 1
    %13 = vsyncpa %s12, 0
    %14 = vsyncpa [#allocation5], 0
    %s15 = scalar_lea.sflag [#allocation5], 1
    %16 = vsyncpa %s15, 0
    loop: start=0, step=1, limit=4
    $region2: #{tpu_custom_call.1} parent=1 // loop_pre_header
      _
    $region3: #{tpu_custom_call.1} parent=1 // loop_header
      %s18 = sphi 0, %s22
      %p19 = scmp.ge.s32.totalorder %s18, 4
      %s25 = sphi 0, %s44
      %s26 = sphi 0, %s40
      %s27 = sphi 0, %s36
      %s28 = sphi 0, %s25
      %s29 = sphi 0, %s26
      %s30 = sphi 0, %s27
      %s31 = sphi 0, %s28
      %s32 = sphi 0, %s29
      %s33 = sphi 0, %s30
      %s45 = sphi 0, %s45
      %s47 = sphi 0, %s45
      %s48 = sphi 0, %s47
      %s62 = sphi 0, %s48
      %s70 = sphi 0, %s72
      %s73 = sphi 0, %s70
      %s74 = sphi 0, %s73
      %s90 = sphi 0, %s74
      %s98 = sphi 0, %s100
      %s101 = sphi 0, %s98
      %s102 = sphi 0, %s101
      %s118 = sphi 0, %s102
      %s126 = sphi 0, %s128
      %s129 = sphi 0, %s126
      %s130 = sphi 0, %s129
      %s146 = sphi 0, %s130
      %s154 = sphi 0, %s156
      %s157 = sphi 0, %s154
      %s158 = sphi 0, %s157
      %s174 = sphi 0, %s158
      %s184 = sphi 0, %s186
      %s187 = sphi 0, %s184
      %s188 = sphi 0, %s187
      %s204 = sphi 0, %s188
    $region4: #{tpu_custom_call.1} parent=1 // loop_header_branch
      %21 = sbr.rel (%p19) target = $region8
    $region5: #{tpu_custom_call.1} parent=1 // loop_body
      %s23 = ssub.s32 %s18, 1
      %s24 = ssub.s32 %s18, 2
      %s34 = sadd.s32 1, %s27
      %p35 = scmp.ge.s32.totalorder %s34, 1
      %s36 = scalar_select %p35, 0, %s34
      %s37 = sadd.s32 1, %s26
      %s38 = scalar_select %p35, %s37, %s26
      %p39 = scmp.ge.s32.totalorder %s38, 1
      %s40 = scalar_select %p39, 0, %s38
      %s41 = sadd.s32 1, %s25
      %s42 = scalar_select %p39, %s41, %s25
      %p43 = scmp.ge.s32.totalorder %s42, 2
      %s44 = scalar_select %p43, 0, %s42
      %s46 = sadd.s32 %s45, 1
      %p49 = scmp.eq.s32.totalorder %s18, 1
      %p50 = scmp.ne.s32.totalorder %s45, %s47
      %p51 = scmp.eq.s32.totalorder %s18, 0
      %p52 = por %p50, %p51
      %p53 = scmp.ne.s32.totalorder %s45, %s47
      %p54 = scmp.eq.s32.totalorder %s23, 1
      %p55 = por %p53, %p54
      %p56 = scmp.ne.s32.totalorder %s47, %s48
      %p57 = scmp.eq.s32.totalorder %s23, 0
      %p58 = por %p56, %p57
      %p59 = scmp.ne.s32.totalorder %s47, %s48
      %p60 = scmp.eq.s32.totalorder %s24, 1
      %p61 = por %p59, %p60
      %p63 = scmp.ne.s32.totalorder %s48, %s62
      %p64 = scmp.eq.s32.totalorder %s24, 0
      %p65 = por %p63, %p64
      %s66 = ssub.s32 %s25, %s44
      %s67 = ssub.s32 %s26, %s40
      %s68 = sor.u32 %s66, %s67
      %p69 = scmp.eq.s32.totalorder %s68, 0
      %s71 = sadd.s32 %s70, 1
      %s72 = scalar_select %p69, %s70, %s71
      %p75 = pneg %p69
      %p76 = scmp.eq.s32.totalorder %s18, 1
      %p77 = por %p75, %p76
      %p78 = scmp.ne.s32.totalorder %s70, %s73
      %p79 = scmp.eq.s32.totalorder %s18, 0
      %p80 = por %p78, %p79
      %p81 = scmp.ne.s32.totalorder %s70, %s73
      %p82 = scmp.eq.s32.totalorder %s23, 1
      %p83 = por %p81, %p82
      %p84 = scmp.ne.s32.totalorder %s73, %s74
      %p85 = scmp.eq.s32.totalorder %s23, 0
      %p86 = por %p84, %p85
      %p87 = scmp.ne.s32.totalorder %s73, %s74
      %p88 = scmp.eq.s32.totalorder %s24, 1
      %p89 = por %p87, %p88
      %p91 = scmp.ne.s32.totalorder %s74, %s90
      %p92 = scmp.eq.s32.totalorder %s24, 0
      %p93 = por %p91, %p92
      %s94 = ssub.s32 %s25, %s44
      %s95 = ssub.s32 %s27, %s36
      %s96 = sor.u32 %s94, %s95
      %p97 = scmp.eq.s32.totalorder %s96, 0
      %s99 = sadd.s32 %s98, 1
      %s100 = scalar_select %p97, %s98, %s99
      %p103 = pneg %p97
      %p104 = scmp.eq.s32.totalorder %s18, 1
      %p105 = por %p103, %p104
      %p106 = scmp.ne.s32.totalorder %s98, %s101
      %p107 = scmp.eq.s32.totalorder %s18, 0
      %p108 = por %p106, %p107
      %p109 = scmp.ne.s32.totalorder %s98, %s101
      %p110 = scmp.eq.s32.totalorder %s23, 1
      %p111 = por %p109, %p110
      %p112 = scmp.ne.s32.totalorder %s101, %s102
      %p113 = scmp.eq.s32.totalorder %s23, 0
      %p114 = por %p112, %p113
      %p115 = scmp.ne.s32.totalorder %s101, %s102
      %p116 = scmp.eq.s32.totalorder %s24, 1
      %p117 = por %p115, %p116
      %p119 = scmp.ne.s32.totalorder %s102, %s118
      %p120 = scmp.eq.s32.totalorder %s24, 0
      %p121 = por %p119, %p120
      %s122 = ssub.s32 %s25, %s44
      %s123 = ssub.s32 %s26, %s40
      %s124 = sor.u32 %s122, %s123
      %p125 = scmp.eq.s32.totalorder %s124, 0
      %s127 = sadd.s32 %s126, 1
      %s128 = scalar_select %p125, %s126, %s127
      %p131 = pneg %p125
      %p132 = scmp.eq.s32.totalorder %s18, 1
      %p133 = por %p131, %p132
      %p134 = scmp.ne.s32.totalorder %s126, %s129
      %p135 = scmp.eq.s32.totalorder %s18, 0
      %p136 = por %p134, %p135
      %p137 = scmp.ne.s32.totalorder %s126, %s129
      %p138 = scmp.eq.s32.totalorder %s23, 1
      %p139 = por %p137, %p138
      %p140 = scmp.ne.s32.totalorder %s129, %s130
      %p141 = scmp.eq.s32.totalorder %s23, 0
      %p142 = por %p140, %p141
      %p143 = scmp.ne.s32.totalorder %s129, %s130
      %p144 = scmp.eq.s32.totalorder %s24, 1
      %p145 = por %p143, %p144
      %p147 = scmp.ne.s32.totalorder %s130, %s146
      %p148 = scmp.eq.s32.totalorder %s24, 0
      %p149 = por %p147, %p148
      %s150 = ssub.s32 %s25, %s44
      %s151 = ssub.s32 %s27, %s36
      %s152 = sor.u32 %s150, %s151
      %p153 = scmp.eq.s32.totalorder %s152, 0
      %s155 = sadd.s32 %s154, 1
      %s156 = scalar_select %p153, %s154, %s155
      %p159 = pneg %p153
      %p160 = scmp.eq.s32.totalorder %s18, 1
      %p161 = por %p159, %p160
      %p162 = scmp.ne.s32.totalorder %s154, %s157
      %p163 = scmp.eq.s32.totalorder %s18, 0
      %p164 = por %p162, %p163
      %p165 = scmp.ne.s32.totalorder %s154, %s157
      %p166 = scmp.eq.s32.totalorder %s23, 1
      %p167 = por %p165, %p166
      %p168 = scmp.ne.s32.totalorder %s157, %s158
      %p169 = scmp.eq.s32.totalorder %s23, 0
      %p170 = por %p168, %p169
      %p171 = scmp.ne.s32.totalorder %s157, %s158
      %p172 = scmp.eq.s32.totalorder %s24, 1
      %p173 = por %p171, %p172
      %p175 = scmp.ne.s32.totalorder %s158, %s174
      %p176 = scmp.eq.s32.totalorder %s24, 0
      %p177 = por %p175, %p176
      %s178 = ssub.s32 %s25, %s44
      %s179 = ssub.s32 %s26, %s40
      %s180 = sor.u32 %s178, %s179
      %s181 = ssub.s32 %s27, %s36
      %s182 = sor.u32 %s180, %s181
      %p183 = scmp.eq.s32.totalorder %s182, 0
      %s185 = sadd.s32 %s184, 1
      %s186 = scalar_select %p183, %s184, %s185
      %p189 = pneg %p183
      %p190 = scmp.eq.s32.totalorder %s18, 1
      %p191 = por %p189, %p190
      %p192 = scmp.ne.s32.totalorder %s184, %s187
      %p193 = scmp.eq.s32.totalorder %s18, 0
      %p194 = por %p192, %p193
      %p195 = scmp.ne.s32.totalorder %s184, %s187
      %p196 = scmp.eq.s32.totalorder %s23, 1
      %p197 = por %p195, %p196
      %p198 = scmp.ne.s32.totalorder %s187, %s188
      %p199 = scmp.eq.s32.totalorder %s23, 0
      %p200 = por %p198, %p199
      %p201 = scmp.ne.s32.totalorder %s187, %s188
      %p202 = scmp.eq.s32.totalorder %s24, 1
      %p203 = por %p201, %p202
      %p205 = scmp.ne.s32.totalorder %s188, %s204
      %p206 = scmp.eq.s32.totalorder %s24, 0
      %p207 = por %p205, %p206
      %p208 = scmp.le.s32.totalorder 1, %s18
      %p209 = scmp.lt.s32.totalorder %s18, 3
      %p210 = pnand %p208, %p209
      %p211 = pneg %p210
      // Predicated region
      $region9: #{tpu_custom_call.1} parent=5 // pred_check
        _
      $region10: #{tpu_custom_call.1} parent=5 // pred_check_branch
        %213 = sbr.rel (%p210) target = $region12
      $region11: #{tpu_custom_call.1} parent=5 // pred_region
        %s214 = ssub.s32 %s18, 1
        // Predicated region
        $region13: #{tpu_custom_call.1} parent=11 // pred_check
          %p215 = pneg %p58
        $region14: #{tpu_custom_call.1} parent=11 // pred_check_branch
          %217 = sbr.rel (%p215) target = $region16
        $region15: #{tpu_custom_call.1} parent=11 // pred_region
          _
        $region16: #{tpu_custom_call.1} parent=11 // pred_fallthru
          _
      $region12: #{tpu_custom_call.1} parent=5 // pred_fallthru
        _
      %p218 = scmp.lt.s32.totalorder %s18, 2
      // Predicated region
      $region17: #{tpu_custom_call.1} parent=5 // pred_check
        %p219 = pneg %p218
      $region18: #{tpu_custom_call.1} parent=5 // pred_check_branch
        %221 = sbr.rel (%p219) target = $region20
      $region19: #{tpu_custom_call.1} parent=5 // pred_region
        // Predicated region
        $region21: #{tpu_custom_call.1} parent=19 // pred_check
          %p222 = pneg %p80
        $region22: #{tpu_custom_call.1} parent=19 // pred_check_branch
          %224 = sbr.rel (%p222) target = $region24
        $region23: #{tpu_custom_call.1} parent=19 // pred_region
          %s225 = smul.u32 2, %s26
          %p226 = scmp.lt.s32.totalorder %s25, 1
          %s227 = scalar_select %p226, %s25, 1
          %p228 = scmp.lt.s32.totalorder %s225, 1
          %s229 = scalar_select %p228, %s225, 1
          %s230 = smul.addr %s227, 2
          %s231 = sadd.s32 %s229, %s230
          %s232 = smul.addr %s231, 8
          %s233 = scalar_lea.vmem %s1, %s232
          %s234 = smul.u32 2, %s26
        $region24: #{tpu_custom_call.1} parent=19 // pred_fallthru
          _
        // Predicated region
        $region25: #{tpu_custom_call.1} parent=19 // pred_check
          %p235 = pneg %p108
        $region26: #{tpu_custom_call.1} parent=19 // pred_check_branch
          %237 = sbr.rel (%p235) target = $region28
        $region27: #{tpu_custom_call.1} parent=19 // pred_region
          %s238 = sand.u32 %s98, 1
          %s239 = scalar_lea.sflag [#allocation4], %s238
          %s240 = sand.u32 %s98, 1
          %s241 = smul.addr %s240, 32
          %s242 = scalar_lea.vmem [#allocation3], %s241
          %s244 = ssub.s32 512, 512
          %245 = vsyncadd %s239, %s244
          %s246 = smul.addr %s25, 4
          %s247 = sadd.s32 %s27, %s246
          %s248 = smul.addr %s247, 128
          %s249 = scalar_lea.hbm %s2, %s248
          %s250 = sshll.u32 %s242, 4
          %s251 = int_to_ptr.vmem [resolvable:$true] %s250
          %256 = dma.hbm_to_vmem [thread:$0]  %s249, 512, %s251, %s239, 128, 128, 8
        $region28: #{tpu_custom_call.1} parent=19 // pred_fallthru
          _
        // Predicated region
        $region29: #{tpu_custom_call.1} parent=19 // pred_check
          %p257 = pneg %p136
        $region30: #{tpu_custom_call.1} parent=19 // pred_check_branch
          %259 = sbr.rel (%p257) target = $region32
        $region31: #{tpu_custom_call.1} parent=19 // pred_region
          %s260 = smul.u32 2, %s26
          %p261 = scmp.lt.s32.totalorder %s25, 1
          %s262 = scalar_select %p261, %s25, 1
          %p263 = scmp.lt.s32.totalorder %s260, 1
          %s264 = scalar_select %p263, %s260, 1
          %s265 = smul.addr %s262, 2
          %s266 = sadd.s32 %s264, %s265
          %s267 = smul.addr %s266, 8
          %s268 = scalar_lea.vmem %s3, %s267
          %s269 = smul.u32 2, %s26
        $region32: #{tpu_custom_call.1} parent=19 // pred_fallthru
          _
        // Predicated region
        $region33: #{tpu_custom_call.1} parent=19 // pred_check
          %p270 = pneg %p164
        $region34: #{tpu_custom_call.1} parent=19 // pred_check_branch
          %272 = sbr.rel (%p270) target = $region36
        $region35: #{tpu_custom_call.1} parent=19 // pred_region
          %p273 = scmp.lt.s32.totalorder %s25, 1
          %s274 = scalar_select %p273, %s25, 1
          %p275 = scmp.lt.s32.totalorder %s27, 0
          %s276 = scalar_select %p275, %s27, 0
          %s277 = sadd.s32 %s276, %s274
          %s278 = scalar_lea.vmem %s4, %s277
        $region36: #{tpu_custom_call.1} parent=19 // pred_fallthru
          _
      $region20: #{tpu_custom_call.1} parent=5 // pred_fallthru
        _
      %p279 = scmp.le.s32.totalorder 1, %s18
      %p280 = scmp.lt.s32.totalorder %s18, 3
      %p281 = pnand %p279, %p280
      %p282 = pneg %p281
      // Predicated region
      $region37: #{tpu_custom_call.1} parent=5 // pred_check
        _
      $region38: #{tpu_custom_call.1} parent=5 // pred_check_branch
        %284 = sbr.rel (%p281) target = $region40
      $region39: #{tpu_custom_call.1} parent=5 // pred_region
        %s285 = ssub.s32 %s18, 1
        %s286 = sand.u32 %s101, 1
        %s287 = scalar_lea.sflag [#allocation4], %s286
        %s288 = sand.u32 %s101, 1
        %s289 = smul.addr %s288, 32
        %s290 = scalar_lea.vmem [#allocation3], %s289
        // Predicated region
        $region41: #{tpu_custom_call.1} parent=39 // pred_check
          %p291 = pneg %p114
        $region42: #{tpu_custom_call.1} parent=39 // pred_check_branch
          %293 = sbr.rel (%p291) target = $region44
        $region43: #{tpu_custom_call.1} parent=39 // pred_region
          %294 = dma.done %s287, 512
        $region44: #{tpu_custom_call.1} parent=39 // pred_fallthru
          _
        %p295 = pneg %p58
        %p296 = pneg %p55
        %s297 = smul.u32 2, %s29
        %p298 = scmp.lt.s32.totalorder %s28, 1
        %s299 = scalar_select %p298, %s28, 1
        %p300 = scmp.lt.s32.totalorder %s297, 1
        %s301 = scalar_select %p300, %s297, 1
        %s302 = smul.addr %s299, 2
        %s303 = sadd.s32 %s301, %s302
        %s304 = smul.addr %s303, 8
        %s305 = scalar_lea.vmem %s1, %s304
        %p306 = pneg %p86
        %p307 = pneg %p83
        %s308 = sand.u32 %s101, 1
        %s309 = scalar_lea.sflag [#allocation4], %s308
        %s310 = sand.u32 %s101, 1
        %s311 = smul.addr %s310, 32
        %s312 = scalar_lea.vmem [#allocation3], %s311
        %p313 = pneg %p114
        %p314 = pneg %p111
        %s315 = smul.u32 2, %s29
        %p316 = scmp.lt.s32.totalorder %s28, 1
        %s317 = scalar_select %p316, %s28, 1
        %p318 = scmp.lt.s32.totalorder %s315, 1
        %s319 = scalar_select %p318, %s315, 1
        %s320 = smul.addr %s317, 2
        %s321 = sadd.s32 %s319, %s320
        %s322 = smul.addr %s321, 8
        %s323 = scalar_lea.vmem %s3, %s322
        %p324 = pneg %p142
        %p325 = pneg %p139
        %p326 = scmp.lt.s32.totalorder %s28, 1
        %s327 = scalar_select %p326, %s28, 1
        %p328 = scmp.lt.s32.totalorder %s30, 0
        %s329 = scalar_select %p328, %s30, 0
        %s330 = sadd.s32 %s329, %s327
        %s331 = scalar_lea.vmem %s4, %s330
        %p332 = pneg %p170
        %p333 = pneg %p167
        %p334 = pneg %p200
        %p335 = pneg %p197
        %s336 = sand.u32 %s187, 1
        %s337 = scalar_lea.sflag [#allocation5], %s336
        %s338 = sand.u32 %s187, 1
        %s339 = smul.addr %s338, 16
        %s340 = scalar_lea.vmem [#allocation6], %s339
        %s341 = smul.u32 2, %s29
        %p342 = scmp.lt.s32.totalorder %s28, 1
        %s343 = scalar_select %p342, %s28, 1
        %p344 = scmp.lt.s32.totalorder %s341, 1
        %s345 = scalar_select %p344, %s341, 1
        %s346 = smul.addr %s343, 2
        %s347 = sadd.s32 %s345, %s346
        %s348 = smul.addr %s347, 8
        %s349 = scalar_lea.vmem %s1, %s348
        %s350 = smul.u32 2, %s29
        %s351 = smul.u32 2, %s29
        %p352 = scmp.lt.s32.totalorder %s28, 1
        %s353 = scalar_select %p352, %s28, 1
        %p354 = scmp.lt.s32.totalorder %s351, 1
        %s355 = scalar_select %p354, %s351, 1
        %s356 = smul.addr %s353, 2
        %s357 = sadd.s32 %s355, %s356
        %s358 = smul.addr %s357, 8
        %s359 = scalar_lea.vmem %s3, %s358
        %s360 = smul.u32 2, %s29
        %p361 = scmp.lt.s32.totalorder %s28, 1
        %s362 = scalar_select %p361, %s28, 1
        %p363 = scmp.lt.s32.totalorder %s30, 0
        %s364 = scalar_select %p363, %s30, 0
        %s365 = sadd.s32 %s364, %s362
        %s366 = scalar_lea.vmem %s4, %s365
        %s367 = smul.u32 2, %s29
        %v368 = vld [vmem:[%s349] sm:$0xff]
        %v369 = vld [vmem:[%s349 + $0x8] sm:$0xff]
        %v370 = vld [vmem:[%s290] sm:$0xff]
        %v371 = vld [vmem:[%s290 + $0x8] sm:$0xff]
        %v372 = vld [vmem:[%s290 + $0x10] sm:$0xff]
        %v373 = vld [vmem:[%s290 + $0x18] sm:$0xff]
        %vm374 = vcmask 261120
        %v376 = vsel %vm374, %v368, 0
        %v379 = vsel %vm374, %v369, 0
        %381 = vmatprep.subr.mxu0 0.0
        %382 = vmatpush1.msra.mxu0 %v370
        %383 = vmatprep.subr.mxu0 0.0
        %384 = vmatpush1.msra.mxu0 %v371
        %385 = vmatprep.subr.mxu0 0.0
        %386 = vmatpush1.msra.mxu0 %v372
        %387 = vmatprep.subr.mxu0 0.0
        %388 = vmatpush1.msra.mxu0 %v373
        %389 = vmatprep.subr.mxu0 0.0
        %390 = vmatpush1.msra.mxu0 0.0
        %391 = vmatprep.subr.mxu0 0.0
        %392 = vmatpush1.msra.mxu0 0.0
        %393 = vmatprep.subr.mxu0 0.0
        %394 = vmatpush1.msra.mxu0 0.0
        %395 = vmatprep.subr.mxu0 0.0
        %396 = vmatpush1.msra.mxu0 0.0
        %397 = vmatprep.subr.mxu0 0.0
        %398 = vmatpush1.msra.mxu0 0.0
        %399 = vmatprep.subr.mxu0 0.0
        %400 = vmatpush1.msra.mxu0 0.0
        %401 = vmatprep.subr.mxu0 0.0
        %402 = vmatpush1.msra.mxu0 0.0
        %403 = vmatprep.subr.mxu0 0.0
        %404 = vmatpush1.msra.mxu0 0.0
        %405 = vmatprep.subr.mxu0 0.0
        %406 = vmatpush1.msra.mxu0 0.0
        %407 = vmatprep.subr.mxu0 0.0
        %408 = vmatpush1.msra.mxu0 0.0
        %409 = vmatprep.subr.mxu0 0.0
        %410 = vmatpush1.msra.mxu0 0.0
        %411 = vmatprep.subr.mxu0 0.0
        %412 = vmatpush1.msra.mxu0 0.0
        %413 = vmatprep.subr.mxu0 0.0
        %414 = vmatpush1.msra.mxu0 0.0
        %415 = vmatprep.subr.mxu0 0.0
        %416 = vmatpush1.msra.mxu0 0.0
        %417 = vmatprep.subr.mxu0 0.0
        %418 = vmatpush1.msra.mxu0 0.0
        %419 = vmatprep.subr.mxu0 0.0
        %420 = vmatpush1.msra.mxu0 0.0
        %421 = vmatprep.subr.mxu0 0.0
        %422 = vmatpush1.msra.mxu0 0.0
        %423 = vmatprep.subr.mxu0 0.0
        %424 = vmatpush1.msra.mxu0 0.0
        %425 = vmatprep.subr.mxu0 0.0
        %426 = vmatpush1.msra.mxu0 0.0
        %427 = vmatprep.subr.mxu0 0.0
        %428 = vmatpush1.msra.mxu0 0.0
        %429 = vmatprep.subr.mxu0 0.0
        %430 = vmatpush1.msra.mxu0 0.0
        %431 = vmatprep.subr.mxu0 0.0
        %432 = vmatpush1.msra.mxu0 0.0
        %433 = vmatprep.subr.mxu0 0.0
        %434 = vmatpush1.msra.mxu0 0.0
        %435 = vmatprep.subr.mxu0 0.0
        %436 = vmatpush1.msra.mxu0 0.0
        %437 = vmatprep.subr.mxu0 0.0
        %438 = vmatpush1.msra.mxu0 0.0
        %439 = vmatprep.subr.mxu0 0.0
        %440 = vmatpush1.msra.mxu0 0.0
        %441 = vmatprep.subr.mxu0 0.0
        %442 = vmatpush1.msra.mxu0 0.0
        %443 = vmatprep.subr.mxu0 0.0
        %444 = vmatpush1.msra.mxu0 0.0
        %445 = vmatprep.mubr.f32.mxu0 0.0
        %446 = vmatmul.mubr.f32.gmra.mrb[0].mxu0 %v376
        %v447 = vpop.f32.mrb[0].mxu0
        %v448 = vadd.f32 0.0, %v447
        %v449 = vpop.f32.mrb[0].mxu0
        %450 = vmatprep.mubr.f32.mxu0 0.0
        %451 = vmatmul.mubr.f32.gmra.mrb[0].mxu0 %v379
        %v452 = vpop.f32.mrb[0].mxu0
        %v453 = vadd.f32 0.0, %v452
        %v454 = vpop.f32.mrb[0].mxu0
        %455 = vdwg.mxu0
        %v456 = vld [vmem:[%s359] sm:$0xff]
        %v457 = vld [vmem:[%s359 + $0x8] sm:$0xff]
        %v458 = vld [vmem:[%s366] sm:$0x1]
        %s459 = sld [smem:[#allocation2]]
        %461 = vset.pattern.permute.xlu0 0
        %462 = vperm.xlu0 %461, %v456
        %v463 = vpop.permute.xlu0 %462
        %466 = vset.pattern.permute.xlu0 0
        %467 = vperm.xlu0 %466, %v457
        %v468 = vpop.permute.xlu0 %467
        %v471 = vlaneseq
        %v472 = vshrl.u32 %v471, 7
        %v473 = vsub.s32 0, %v472
        %v474 = vrot.slane %v458, %v473
        %v476 = vadd.f32 %v463, %v474
        %v477 = vadd.f32 %v468, %v474
        %v478 = vmul.f32 %v448, 2.0
        %v479 = vmul.f32 %v453, 2.0
        %v480 = vsub.f32 %v476, %v478
        %v481 = vsub.f32 %v477, %v479
        %v482 = vmax.f32 %v480, 0.0
        %v483 = vmax.f32 %v481, 0.0
        %v484 = vrsqrt.pop %v482
        %v485 = vmul.f32 %v482, %v484
        %vm486 = vcmp.eq.f32.partialorder %v482, inf
        %v487 = vsel %vm486, %v482, %v485
        %vm488 = vcmp.eq.f32.partialorder %v482, 0.0
        %v489 = vand.u32 %v482, 2147483648
        %v490 = vsel %vm488, %v489, %v487
        %v491 = vrsqrt.pop %v483
        %v492 = vmul.f32 %v483, %v491
        %vm493 = vcmp.eq.f32.partialorder %v483, inf
        %v494 = vsel %vm493, %v483, %v492
        %vm495 = vcmp.eq.f32.partialorder %v483, 0.0
        %v496 = vand.u32 %v483, 2147483648
        %v497 = vsel %vm495, %v496, %v494
        %v498 = vstv %s459
        %v499 = vadd.f32 %v490, %v498
        %v500 = vadd.f32 %v497, %v498
        %v501 = vrcp.pop %v499
        %v502 = vrcp.pop %v500
        %v503 = vmul.f32 %v498, %v501
        %v504 = vmul.f32 %v498, %v502
        %505 = vst [vmem:[%s340] sm:$0xff] %v503
        %506 = vst [vmem:[%s340 + $0x8] sm:$0xff] %v504
        %s507 = sand.u32 %s187, 1
        %s508 = scalar_lea.sflag [#allocation5], %s507
        %s509 = sand.u32 %s187, 1
        %s510 = smul.addr %s509, 16
        %s511 = scalar_lea.vmem [#allocation6], %s510
        // Predicated region
        $region45: #{tpu_custom_call.1} parent=39 // pred_check
          %p512 = pneg %p197
        $region46: #{tpu_custom_call.1} parent=39 // pred_check_branch
          %514 = sbr.rel (%p512) target = $region48
        $region47: #{tpu_custom_call.1} parent=39 // pred_region
          %s515 = smul.u32 2, %s29
          %s517 = ssub.s32 256, 256
          %518 = vsyncadd %s508, %s517
          %s519 = sadd.s32 %s30, %s515
          %s520 = smul.addr %s28, 2
          %s521 = sadd.s32 %s519, %s520
          %s522 = smul.addr %s521, 128
          %s523 = scalar_lea.hbm %s5, %s522
          %s524 = sshll.u32 %s511, 4
          %s525 = int_to_ptr.vmem [resolvable:$true] %s524
          %530 = dma.vmem_to_hbm [thread:$0]  %s525, 256, %s523, %s508, 128, 128, 8
        $region48: #{tpu_custom_call.1} parent=39 // pred_fallthru
          _
      $region40: #{tpu_custom_call.1} parent=5 // pred_fallthru
        _
      %p531 = scmp.le.s32.totalorder 2, %s18
      // Predicated region
      $region49: #{tpu_custom_call.1} parent=5 // pred_check
        %p532 = pneg %p531
      $region50: #{tpu_custom_call.1} parent=5 // pred_check_branch
        %534 = sbr.rel (%p532) target = $region52
      $region51: #{tpu_custom_call.1} parent=5 // pred_region
        %s535 = ssub.s32 %s18, 2
        // Predicated region
        $region53: #{tpu_custom_call.1} parent=51 // pred_check
          %p536 = pneg %p203
        $region54: #{tpu_custom_call.1} parent=51 // pred_check_branch
          %538 = sbr.rel (%p536) target = $region56
        $region55: #{tpu_custom_call.1} parent=51 // pred_region
          %s539 = sand.u32 %s188, 1
          %s540 = scalar_lea.sflag [#allocation5], %s539
          %s541 = sand.u32 %s188, 1
          %s542 = smul.addr %s541, 16
          %s543 = scalar_lea.vmem [#allocation6], %s542
          %544 = dma.done %s540, 256
        $region56: #{tpu_custom_call.1} parent=51 // pred_fallthru
          _
      $region52: #{tpu_custom_call.1} parent=5 // pred_fallthru
        _
    $region6: #{tpu_custom_call.1} parent=1 // loop_footer
      %s22 = sadd.s32 1, %s18
    $region7: #{tpu_custom_call.1} parent=1 // loop_footer_branch
      %17 = sbr.rel target = $region3
    $region8: #{tpu_custom_call.1} parent=1 // loop_exit
      _
    %545 = vsyncpa [#allocation4], 1
    %s546 = scalar_lea.sflag [#allocation4], 1
    %547 = vsyncpa %s546, 1
    %548 = vsyncpa [#allocation5], 1
    %s549 = scalar_lea.sflag [#allocation5], 1
    %550 = vsyncpa %s549, 1

</llo_original>
